<compile_context>
chip_gen: v5e
topology: v5e:2x2
jax: 0.10.0
libtpu: 0.0.40
codegen_flags: <defaults>
</compile_context>

<pallas_src>
import functools

import jax
import jax.numpy as jnp
from jax.experimental import pallas as pl
from jax.experimental.pallas import tpu as pltpu


def _volsdf_alpha_kernel(beta_ref, geo_ref, z_ref, *norm_and_out, samples, fold):
    norm_refs = norm_and_out[:fold]      # fold x (TR, 1)  per-ray ||rays_d[:, 0]||
    out_ref = norm_and_out[fold]         # (TR, L)

    beta = beta_ref[0]
    inv_beta = 1.0 / beta

    g = geo_ref[...]                     # (TR, L)  sdf values, L = fold * samples
    z = z_ref[...]                       # (TR, L)  z_vals
    shape = z.shape
    lanes = shape[-1]

    # ---- VolSDF Laplace-CDF density with a single exp (no inf in a dead branch) ----
    a = jnp.exp(-jnp.abs(g) * inv_beta)
    val = inv_beta * jnp.where(g >= 0.0, 0.5 * a, 1.0 - 0.5 * a)

    # ---- dists = z[i+1] - z[i] via XLU lane roll + iota mask (no ragged slices) ----
    lane = jax.lax.broadcasted_iota(jnp.int32, shape, 1)
    z_next = pltpu.roll(z, shift=lanes - 1, axis=1)   # == jnp.roll(z, -1): lane i <- z[i+1]
    d = z_next - z

    # Per-ray norm: lane l belongs to folded ray l // samples within the row.
    nrm = jnp.broadcast_to(norm_refs[0][...], shape)
    for f in range(1, fold):
        nrm = jnp.where(lane >= f * samples,
                        jnp.broadcast_to(norm_refs[f][...], shape), nrm)

    is_last = lane == (samples - 1)
    for f in range(1, fold):
        is_last = jnp.logical_or(is_last, lane == ((f + 1) * samples - 1))

    # The 1e10 pad is NOT scaled by the ray norm (matches the reference exactly).
    dists = jnp.where(is_last, jnp.float32(1.0e10), d * nrm)

    # ---- raw2alpha: 1 - exp(-softplus(val - 10) * dists), torch softplus threshold=20
    raw = val - 10.0
    sp = jnp.where(raw > 20.0, raw, jnp.log1p(jnp.exp(jnp.minimum(raw, 20.0))))
    out_ref[...] = 1.0 - jnp.exp(-sp * dists)


def _round_up(x: int, m: int) -> int:
    return ((x + m - 1) // m) * m


def volsdf_geo2alpha(geo, z_vals, rays_d, beta=0.1):
    """geo: (R, S, 1), z_vals: (R, S), rays_d: (R, S, 3) -> alpha: (R, S) float32."""
    R, S, _ = geo.shape

    # Fold rays per kernel row so the lane dim is a multiple of 128; fall back to
    # fold=1 when shapes do not allow it.
    if S % 128 == 0:
        fold = 1
    elif 128 % S == 0 and S >= 16 and R % (128 // S) == 0:
        fold = 128 // S
    else:
        fold = 1
    Rf = R // fold
    L = fold * S

    # Layout plumbing (expected to fuse with surrounding graph in a real pipeline).
    geo2d = geo.astype(jnp.float32).reshape(Rf, L)
    zf = z_vals.astype(jnp.float32).reshape(Rf, L)
    ray_norm = jnp.linalg.norm(rays_d[:, 0, :].astype(jnp.float32), axis=-1)   # (R,)
    norms = [ray_norm[f::fold].reshape(Rf, 1) for f in range(fold)]

    # Tile sizing: ~1 MiB per f32 stream block; double-buffered (geo, z, out) stays
    # around 6 MiB of VMEM on every generation while amortizing per-step overhead.
    row_bytes = L * 4
    rf8 = _round_up(Rf, 8)
    tile_rows = max(8, min(rf8, ((1 << 20) // row_bytes) // 8 * 8))
    # On non-tiny problems keep >= 2 grid steps so v7x's two TensorCores both get
    # work via the "parallel" grid axis (no effect on single-TC v5e/v6e).
    if tile_rows >= rf8 and rf8 >= 16 and rf8 * row_bytes > (512 << 10):
        tile_rows = max(8, _round_up(rf8 // 2, 8))
    rf_pad = _round_up(rf8, tile_rows)

    if rf_pad != Rf:
        pad = rf_pad - Rf
        geo2d = jnp.pad(geo2d, ((0, pad), (0, 0)))
        zf = jnp.pad(zf, ((0, pad), (0, 0)))
        norms = [jnp.pad(n, ((0, pad), (0, 0))) for n in norms]

    beta_arr = jnp.asarray([beta], dtype=jnp.float32)   # learnable scalar (init 0.1)
    grid = (rf_pad // tile_rows,)

    row_spec = pl.BlockSpec((tile_rows, L), lambda i: (i, 0))
    norm_spec = pl.BlockSpec((tile_rows, 1), lambda i: (i, 0))
    kernel = functools.partial(_volsdf_alpha_kernel, samples=S, fold=fold)

    out = pl.pallas_call(
        kernel,
        out_shape=jax.ShapeDtypeStruct((rf_pad, L), jnp.float32),
        grid_spec=pltpu.PrefetchScalarGridSpec(
            num_scalar_prefetch=0,
            grid=grid,
            in_specs=[pl.BlockSpec(memory_space=pltpu.MemorySpace.SMEM),   # beta scalar
                      row_spec,                                            # geo (folded)
                      row_spec]                                            # z_vals (folded)
                     + [norm_spec] * fold,                                 # per-ray norms
            out_specs=row_spec,
        ),
        compiler_params=pltpu.CompilerParams(
            dimension_semantics=("parallel",),
            vmem_limit_bytes=32 * 1024 * 1024,
        ),
    )(beta_arr, geo2d, zf, *norms)

    return out[:Rf].reshape(R, S)


def _reference(geo, z_vals, rays_d, beta=0.1):
    """Pure-JAX mirror of the PyTorch module (volsdf_geo2alpha.forward)."""
    x = -geo
    inv_beta = 1.0 / beta
    val = jnp.where(x <= 0.0,
                    inv_beta * (0.5 * jnp.exp(x * inv_beta)),
                    inv_beta * (1.0 - 0.5 * jnp.exp(-x * inv_beta)))
    dists = z_vals[..., 1:] - z_vals[..., :-1]
    dists = dists * jnp.linalg.norm(rays_d[:, 0], axis=-1, keepdims=True)
    dists = jnp.concatenate(
        [dists, jnp.broadcast_to(jnp.float32(1.0e10), dists[..., :1].shape)], -1)
    raw = val[..., 0] - 10.0
    sp = jnp.where(raw > 20.0, raw, jnp.log1p(jnp.exp(jnp.minimum(raw, 20.0))))
    return 1.0 - jnp.exp(-sp * dists)


if __name__ == "__main__":
    R, S = 64, 64  # rays, samples-per-ray (folds to 32 x 128 lane-dense rows)
    key = jax.random.PRNGKey(0)
    k1, k2, k3 = jax.random.split(key, 3)

    geo = 0.1 * jax.random.normal(k1, (R, S, 1), dtype=jnp.float32)
    z_vals = jnp.sort(2.0 + 4.0 * jax.random.uniform(k2, (R, S), dtype=jnp.float32),
                      axis=-1)
    rays_d = jax.random.normal(k3, (R, S, 3), dtype=jnp.float32)

    alpha = jax.block_until_ready(volsdf_geo2alpha(geo, z_vals, rays_d, beta=0.1))
    ref = _reference(geo, z_vals, rays_d, beta=0.1)

    assert alpha.shape == (R, S)
    assert bool(jnp.all(jnp.isfinite(alpha)))
    assert jnp.allclose(alpha, ref, rtol=1e-4, atol=1e-4), "mismatch vs reference"

    print("KERNEL_OK")
</pallas_src>

<mosaic_0001>
module attributes {stable_mosaic.version = 11 : i64} {
  func.func @_volsdf_alpha_kernel(%arg0: i32, %arg1: memref<1xf32, #tpu.memory_space<smem>>, %arg2: memref<32x128xf32, #tpu.memory_space<vmem>>, %arg3: memref<32x128xf32, #tpu.memory_space<vmem>>, %arg4: memref<32x1xf32, #tpu.memory_space<vmem>>, %arg5: memref<32x1xf32, #tpu.memory_space<vmem>>, %arg6: memref<32x128xf32, #tpu.memory_space<vmem>>) attributes {dimension_semantics = [#tpu.dimension_semantics<parallel>], iteration_bounds = array<i64: 1>, scalar_prefetch = 0 : i64, scratch_operands = 0 : i64, tpu.core_type = #tpu.core_type<tc>, window_params = [{transform_indices = @transform_0, window_bounds = array<i64: 1>}, {transform_indices = @transform_1, window_bounds = array<i64: 32, 128>}, {transform_indices = @transform_2, window_bounds = array<i64: 32, 128>}, {transform_indices = @transform_3, window_bounds = array<i64: 32, 1>}, {transform_indices = @transform_4, window_bounds = array<i64: 32, 1>}, {transform_indices = @transform_5, window_bounds = array<i64: 32, 128>}]} {
    %c0 = arith.constant 0 : index
    %0 = memref.load %arg1[%c0] : memref<1xf32, #tpu.memory_space<smem>>
    %cst = arith.constant 1.000000e+00 : f32
    %1 = arith.divf %cst, %0 : f32
    %c0_0 = arith.constant 0 : index
    %c0_1 = arith.constant 0 : index
    %2 = vector.load %arg2[%c0_0, %c0_1] : memref<32x128xf32, #tpu.memory_space<vmem>>, vector<32x128xf32>
    %c0_2 = arith.constant 0 : index
    %c0_3 = arith.constant 0 : index
    %3 = vector.load %arg3[%c0_2, %c0_3] : memref<32x128xf32, #tpu.memory_space<vmem>>, vector<32x128xf32>
    %4 = math.absf %2 : vector<32x128xf32>
    %cst_4 = arith.constant 0.000000e+00 : f32
    %5 = vector.broadcast %cst_4 : f32 to vector<32x128xf32>
    %6 = arith.subf %5, %4 : vector<32x128xf32>
    %7 = vector.broadcast %1 : f32 to vector<32x128xf32>
    %8 = arith.mulf %6, %7 : vector<32x128xf32>
    %9 = math.exp %8 : vector<32x128xf32>
    %cst_5 = arith.constant 0.000000e+00 : f32
    %10 = vector.broadcast %cst_5 : f32 to vector<32x128xf32>
    %11 = arith.cmpf oge, %2, %10 : vector<32x128xf32>
    %cst_6 = arith.constant 5.000000e-01 : f32
    %12 = vector.broadcast %cst_6 : f32 to vector<32x128xf32>
    %13 = arith.mulf %12, %9 : vector<32x128xf32>
    %cst_7 = arith.constant 5.000000e-01 : f32
    %14 = vector.broadcast %cst_7 : f32 to vector<32x128xf32>
    %15 = arith.mulf %14, %9 : vector<32x128xf32>
    %cst_8 = arith.constant 1.000000e+00 : f32
    %16 = vector.broadcast %cst_8 : f32 to vector<32x128xf32>
    %17 = arith.subf %16, %15 : vector<32x128xf32>
    %18 = arith.select %11, %13, %17 : vector<32x128xi1>, vector<32x128xf32>
    %19 = vector.broadcast %1 : f32 to vector<32x128xf32>
    %20 = arith.mulf %19, %18 : vector<32x128xf32>
    %21 = tpu.iota {dimensions = array<i32: 1>} : vector<32x128xi32>
    %c127_i32 = arith.constant 127 : i32
    %22 = tpu.dynamic_rotate %3 by %c127_i32 dim 1 : vector<32x128xf32>, i32 -> vector<32x128xf32>
    %23 = arith.subf %22, %3 : vector<32x128xf32>
    %c0_9 = arith.constant 0 : index
    %c0_10 = arith.constant 0 : index
    %24 = vector.load %arg4[%c0_9, %c0_10] : memref<32x1xf32, #tpu.memory_space<vmem>>, vector<32x1xf32>
    %25 = vector.shape_cast %24 : vector<32x1xf32> to vector<32x1xf32>
    %26 = vector.broadcast %25 : vector<32x1xf32> to vector<32x128xf32>
    %c64_i32 = arith.constant 64 : i32
    %27 = vector.broadcast %c64_i32 : i32 to vector<32x128xi32>
    %28 = arith.cmpi sge, %21, %27 : vector<32x128xi32>
    %c0_11 = arith.constant 0 : index
    %c0_12 = arith.constant 0 : index
    %29 = vector.load %arg5[%c0_11, %c0_12] : memref<32x1xf32, #tpu.memory_space<vmem>>, vector<32x1xf32>
    %30 = vector.shape_cast %29 : vector<32x1xf32> to vector<32x1xf32>
    %31 = vector.broadcast %30 : vector<32x1xf32> to vector<32x128xf32>
    %32 = arith.select %28, %31, %26 : vector<32x128xi1>, vector<32x128xf32>
    %c63_i32 = arith.constant 63 : i32
    %33 = vector.broadcast %c63_i32 : i32 to vector<32x128xi32>
    %34 = arith.cmpi eq, %21, %33 : vector<32x128xi32>
    %c127_i32_13 = arith.constant 127 : i32
    %35 = vector.broadcast %c127_i32_13 : i32 to vector<32x128xi32>
    %36 = arith.cmpi eq, %21, %35 : vector<32x128xi32>
    %37 = arith.ori %34, %36 : vector<32x128xi1>
    %38 = arith.mulf %23, %32 : vector<32x128xf32>
    %cst_14 = arith.constant 1.000000e+10 : f32
    %39 = vector.broadcast %cst_14 : f32 to vector<32x128xf32>
    %40 = arith.select %37, %39, %38 : vector<32x128xi1>, vector<32x128xf32>
    %cst_15 = arith.constant 1.000000e+01 : f32
    %41 = vector.broadcast %cst_15 : f32 to vector<32x128xf32>
    %42 = arith.subf %20, %41 : vector<32x128xf32>
    %cst_16 = arith.constant 2.000000e+01 : f32
    %43 = vector.broadcast %cst_16 : f32 to vector<32x128xf32>
    %44 = arith.cmpf ogt, %42, %43 : vector<32x128xf32>
    %cst_17 = arith.constant 2.000000e+01 : f32
    %45 = vector.broadcast %cst_17 : f32 to vector<32x128xf32>
    %46 = arith.minimumf %42, %45 : vector<32x128xf32>
    %47 = math.exp %46 : vector<32x128xf32>
    %48 = math.log1p %47 : vector<32x128xf32>
    %49 = arith.select %44, %42, %48 : vector<32x128xi1>, vector<32x128xf32>
    %cst_18 = arith.constant 0.000000e+00 : f32
    %50 = vector.broadcast %cst_18 : f32 to vector<32x128xf32>
    %51 = arith.subf %50, %49 : vector<32x128xf32>
    %52 = arith.mulf %51, %40 : vector<32x128xf32>
    %53 = math.exp %52 : vector<32x128xf32>
    %cst_19 = arith.constant 1.000000e+00 : f32
    %54 = vector.broadcast %cst_19 : f32 to vector<32x128xf32>
    %55 = arith.subf %54, %53 : vector<32x128xf32>
    %c0_20 = arith.constant 0 : index
    %c0_21 = arith.constant 0 : index
    %56 = vector.load %arg6[%c0_20, %c0_21] : memref<32x128xf32, #tpu.memory_space<vmem>>, vector<32x128xf32>
    tpu.vector_store %arg6[%c0_20, %c0_21], %55 {strides = array<i32>} : memref<32x128xf32, #tpu.memory_space<vmem>>, vector<32x128xf32>,
    return
  }
  func.func @transform_0(%arg0: i32) -> i32 {
    %c0_i32 = arith.constant 0 : i32
    %c0_i32_0 = arith.constant 0 : i32
    return %c0_i32 : i32
  }
  func.func @transform_1(%arg0: i32) -> (i32, i32) {
    %c0_i32 = arith.constant 0 : i32
    %c0_i32_0 = arith.constant 0 : i32
    return %arg0, %c0_i32 : i32, i32
  }
  func.func @transform_2(%arg0: i32) -> (i32, i32) {
    %c0_i32 = arith.constant 0 : i32
    %c0_i32_0 = arith.constant 0 : i32
    return %arg0, %c0_i32 : i32, i32
  }
  func.func @transform_3(%arg0: i32) -> (i32, i32) {
    %c0_i32 = arith.constant 0 : i32
    %c0_i32_0 = arith.constant 0 : i32
    return %arg0, %c0_i32 : i32, i32
  }
  func.func @transform_4(%arg0: i32) -> (i32, i32) {
    %c0_i32 = arith.constant 0 : i32
    %c0_i32_0 = arith.constant 0 : i32
    return %arg0, %c0_i32 : i32, i32
  }
  func.func @transform_5(%arg0: i32) -> (i32, i32) {
    %c0_i32 = arith.constant 0 : i32
    %c0_i32_0 = arith.constant 0 : i32
    return %arg0, %c0_i32 : i32, i32
  }
}

</mosaic_0001>

<llo_original>
// kernel: tpu_custom_call.1
$region0: #{tpu_custom_call.1}
  #allocation0 [shape = 'u32[]', space=smem, size = 0x4, offset = 0x4, fixed_abs, tag = 'smem constant byte address 0x4 - core index']
  #allocation1 [shape = 'u32[72,128]{1,0:T(1,128)}', space=vmem, size = 0x9000, scoped, tag = 'internal scratch']
  #allocation2 [shape = 'f32[1]{0:T(128)S(6)}', space=smem, size = 0x200, scoped, tag = 'scoped memory for tpu_custom_call.1']
  %s0 = inlined_call_operand.<no memory space> [shape: f32[1], index: 0, kind: input, shape index: {}]
  %s1 = inlined_call_operand.vmem [shape: f32[32,128], index: 1, kind: input, shape index: {}]
  %s2 = inlined_call_operand.vmem [shape: f32[32,128], index: 2, kind: input, shape index: {}]
  %s3 = inlined_call_operand.vmem [shape: f32[32,1], index: 3, kind: input, shape index: {}]
  %s4 = inlined_call_operand.vmem [shape: f32[32,1], index: 4, kind: input, shape index: {}]
  %s5 = inlined_call_operand.hbm [shape: f32[32,128], index: 5, kind: output, shape index: {}]
  %s6 = sld [smem:[#allocation0]]
  $region30: #{tpu_custom_call.1} parent=0
    _
  %s8 = ssub.s32 1, %s6
  %s9 = scalar_select 0, %s8, %s6
  %10 = sst [smem:[#allocation2]] %s0
  $region1: #{tpu_custom_call.1} parent=0
    #allocation3 [shape = 'u8[16384]{0}', space=vmem, size = 0x4000, scoped, tag = 'output window, operand 0, single buffered']
    #allocation4 [shape = 's32[1]{0}', space=sflag, size = 0x4, scoped, tag = 'scoped memory for tpu_custom_call.1']
    %11 = vsyncpa [#allocation4], 0
    // Predicated region
    $region2: #{tpu_custom_call.1} parent=1 // pred_check
      _
    $region3: #{tpu_custom_call.1} parent=1 // pred_check_branch
      %13 = sbr.rel (0) target = $region5
    $region4: #{tpu_custom_call.1} parent=1 // pred_region
      _
    $region5: #{tpu_custom_call.1} parent=1 // pred_fallthru
      _
    // Predicated region
    $region6: #{tpu_custom_call.1} parent=1 // pred_check
      _
    $region7: #{tpu_custom_call.1} parent=1 // pred_check_branch
      %15 = sbr.rel (0) target = $region9
    $region8: #{tpu_custom_call.1} parent=1 // pred_region
      _
    $region9: #{tpu_custom_call.1} parent=1 // pred_fallthru
      _
    // Predicated region
    $region10: #{tpu_custom_call.1} parent=1 // pred_check
      _
    $region11: #{tpu_custom_call.1} parent=1 // pred_check_branch
      %17 = sbr.rel (0) target = $region13
    $region12: #{tpu_custom_call.1} parent=1 // pred_region
      _
    $region13: #{tpu_custom_call.1} parent=1 // pred_fallthru
      _
    // Predicated region
    $region14: #{tpu_custom_call.1} parent=1 // pred_check
      _
    $region15: #{tpu_custom_call.1} parent=1 // pred_check_branch
      %19 = sbr.rel (0) target = $region17
    $region16: #{tpu_custom_call.1} parent=1 // pred_region
      _
    $region17: #{tpu_custom_call.1} parent=1 // pred_fallthru
      _
    // Predicated region
    $region18: #{tpu_custom_call.1} parent=1 // pred_check
      _
    $region19: #{tpu_custom_call.1} parent=1 // pred_check_branch
      %21 = sbr.rel (0) target = $region21
    $region20: #{tpu_custom_call.1} parent=1 // pred_region
      _
    $region21: #{tpu_custom_call.1} parent=1 // pred_fallthru
      _
    %s22 = sld [smem:[#allocation2]]
    %v23 = vstv %s22
    %v24 = vrcp.pop %v23
    %v25 = vmul.f32 %v23, %v24
    %v26 = vsub.f32 1.0, %v25
    %v27 = vmul.f32 %v24, %v26
    %v28 = vadd.f32 %v24, %v27
    %vm29 = vweird.f32 %v23
    %vm30 = vweird.f32 %v24
    %vm31 = vmor %vm29, %vm30
    %v32 = vsel %vm31, %v24, %v28
    %v33 = vand.u32 2147483647, %v23
    %vm34 = vcmp.eq.f32.partialorder %v33, 8.507059e+37
    %v35 = vand.u32 %v23, 2147483648
    %v36 = vor.u32 1.1754944e-38, %v35
    %v37 = vsel %vm34, %v36, %v32
    %s38 = vtos %v37
    %v39 = vld [vmem:[%s1] sm:$0xff]
    %v40 = vld [vmem:[%s1 + $0x8] sm:$0xff]
    %v41 = vld [vmem:[%s1 + $0x10] sm:$0xff]
    %v42 = vld [vmem:[%s1 + $0x18] sm:$0xff]
    %v43 = vld [vmem:[%s2] sm:$0xff]
    %v44 = vld [vmem:[%s2 + $0x8] sm:$0xff]
    %v45 = vld [vmem:[%s2 + $0x10] sm:$0xff]
    %v46 = vld [vmem:[%s2 + $0x18] sm:$0xff]
    %v47 = vand.u32 2147483647, %v39
    %v48 = vand.u32 2147483647, %v40
    %v49 = vand.u32 2147483647, %v41
    %v50 = vand.u32 2147483647, %v42
    %v51 = vsub.f32 0.0, %v47
    %v52 = vsub.f32 0.0, %v48
    %v53 = vsub.f32 0.0, %v49
    %v54 = vsub.f32 0.0, %v50
    %v55 = vstv %s38
    %v56 = vmul.f32 %v51, %v55
    %v57 = vmul.f32 %v52, %v55
    %v58 = vmul.f32 %v53, %v55
    %v59 = vmul.f32 %v54, %v55
    %v60 = vmul.f32 %v56, 1.442695
    %v61 = vpow.pop %v60
    %v62 = vmul.f32 %v57, 1.442695
    %v63 = vpow.pop %v62
    %v64 = vmul.f32 %v58, 1.442695
    %v65 = vpow.pop %v64
    %v66 = vmul.f32 %v59, 1.442695
    %v67 = vpow.pop %v66
    %vm68 = vcmp.ge.f32.partialorder %v39, 0.0
    %vm69 = vcmp.ge.f32.partialorder %v40, 0.0
    %vm70 = vcmp.ge.f32.partialorder %v41, 0.0
    %vm71 = vcmp.ge.f32.partialorder %v42, 0.0
    %v72 = vmul.f32 %v61, 0.5
    %v73 = vmul.f32 %v63, 0.5
    %v74 = vmul.f32 %v65, 0.5
    %v75 = vmul.f32 %v67, 0.5
    %v76 = vsub.f32 1.0, %v72
    %v77 = vsub.f32 1.0, %v73
    %v78 = vsub.f32 1.0, %v74
    %v79 = vsub.f32 1.0, %v75
    %v80 = vsel %vm68, %v72, %v76
    %v81 = vsel %vm69, %v73, %v77
    %v82 = vsel %vm70, %v74, %v78
    %v83 = vsel %vm71, %v75, %v79
    %v84 = vmul.f32 %v55, %v80
    %v85 = vmul.f32 %v55, %v81
    %v86 = vmul.f32 %v55, %v82
    %v87 = vmul.f32 %v55, %v83
    %v88 = vlaneseq
    %v89 = vand.u32 %v88, 127
    %90 = vrot.lane.b32.xlu0 %v43, 127
    %v91 = vpop.permute.xlu0 %90
    %92 = vrot.lane.b32.xlu0 %v44, 127
    %v93 = vpop.permute.xlu0 %92
    %94 = vrot.lane.b32.xlu0 %v45, 127
    %v95 = vpop.permute.xlu0 %94
    %96 = vrot.lane.b32.xlu0 %v46, 127
    %v97 = vpop.permute.xlu0 %96
    %v98 = vsub.f32 %v91, %v43
    %v99 = vsub.f32 %v93, %v44
    %v100 = vsub.f32 %v95, %v45
    %v101 = vsub.f32 %v97, %v46
    %v102 = vld [vmem:[%s3] sm:$0xff]
    %v103 = vld [vmem:[%s3 + $0x8] sm:$0xff]
    %v104 = vld [vmem:[%s3 + $0x10] sm:$0xff]
    %v105 = vld [vmem:[%s3 + $0x18] sm:$0xff]
    %107 = vset.pattern.permute.xlu0 0
    %108 = vperm.xlu0 %107, %v102
    %v109 = vpop.permute.xlu0 %108
    %112 = vset.pattern.permute.xlu0 0
    %113 = vperm.xlu0 %112, %v103
    %v114 = vpop.permute.xlu0 %113
    %117 = vset.pattern.permute.xlu0 0
    %118 = vperm.xlu0 %117, %v104
    %v119 = vpop.permute.xlu0 %118
    %122 = vset.pattern.permute.xlu0 0
    %123 = vperm.xlu0 %122, %v105
    %v124 = vpop.permute.xlu0 %123
    %vm126 = vcmp.ge.s32.totalorder %v89, 64
    %v127 = vld [vmem:[%s4] sm:$0xff]
    %v128 = vld [vmem:[%s4 + $0x8] sm:$0xff]
    %v129 = vld [vmem:[%s4 + $0x10] sm:$0xff]
    %v130 = vld [vmem:[%s4 + $0x18] sm:$0xff]
    %132 = vset.pattern.permute.xlu0 0
    %133 = vperm.xlu0 %132, %v127
    %v134 = vpop.permute.xlu0 %133
    %137 = vset.pattern.permute.xlu0 0
    %138 = vperm.xlu0 %137, %v128
    %v139 = vpop.permute.xlu0 %138
    %142 = vset.pattern.permute.xlu0 0
    %143 = vperm.xlu0 %142, %v129
    %v144 = vpop.permute.xlu0 %143
    %147 = vset.pattern.permute.xlu0 0
    %148 = vperm.xlu0 %147, %v130
    %v149 = vpop.permute.xlu0 %148
    %v151 = vsel %vm126, %v134, %v109
    %v152 = vsel %vm126, %v139, %v114
    %v153 = vsel %vm126, %v144, %v119
    %v154 = vsel %vm126, %v149, %v124
    %vm155 = vcmp.eq.s32.totalorder %v89, 63
    %vm156 = vcmp.eq.s32.totalorder %v89, 127
    %vm157 = vmor %vm155, %vm156
    %v158 = vmul.f32 %v98, %v151
    %v159 = vmul.f32 %v99, %v152
    %v160 = vmul.f32 %v100, %v153
    %v161 = vmul.f32 %v101, %v154
    %v162 = vsel %vm157, 1e+10, %v158
    %v163 = vsel %vm157, 1e+10, %v159
    %v164 = vsel %vm157, 1e+10, %v160
    %v165 = vsel %vm157, 1e+10, %v161
    %v166 = vsub.f32 %v84, 10.0
    %v167 = vsub.f32 %v85, 10.0
    %v168 = vsub.f32 %v86, 10.0
    %v169 = vsub.f32 %v87, 10.0
    %vm170 = vcmp.gt.f32.partialorder %v166, 20.0
    %vm171 = vcmp.gt.f32.partialorder %v167, 20.0
    %vm172 = vcmp.gt.f32.partialorder %v168, 20.0
    %vm173 = vcmp.gt.f32.partialorder %v169, 20.0
    %v174 = vmin.f32 %v166, 20.0
    %v175 = vmin.f32 %v167, 20.0
    %v176 = vmin.f32 %v168, 20.0
    %v177 = vmin.f32 %v169, 20.0
    %v178 = vmul.f32 %v174, 1.442695
    %v179 = vpow.pop %v178
    %v180 = vmul.f32 %v175, 1.442695
    %v181 = vpow.pop %v180
    %v182 = vmul.f32 %v176, 1.442695
    %v183 = vpow.pop %v182
    %v184 = vmul.f32 %v177, 1.442695
    %v185 = vpow.pop %v184
    %v186 = vadd.f32 %v179, 1.0
    %v187 = vlog2.pop %v186
    %v188 = vmul.f32 %v187, 0.6931472
    %v189 = vmul.f32 -0.5, %v179
    %v190 = vadd.f32 %v189, 1.0
    %v191 = vmul.f32 %v190, %v179
    %v192 = vand.u32 2147483647, %v179
    %vm193 = vcmp.lt.f32.partialorder %v192, 0.0004427343
    %v194 = vsel %vm193, %v191, %v188
    %v195 = vadd.f32 %v181, 1.0
    %v196 = vlog2.pop %v195
    %v197 = vmul.f32 %v196, 0.6931472
    %v198 = vmul.f32 -0.5, %v181
    %v199 = vadd.f32 %v198, 1.0
    %v200 = vmul.f32 %v199, %v181
    %v201 = vand.u32 2147483647, %v181
    %vm202 = vcmp.lt.f32.partialorder %v201, 0.0004427343
    %v203 = vsel %vm202, %v200, %v197
    %v204 = vadd.f32 %v183, 1.0
    %v205 = vlog2.pop %v204
    %v206 = vmul.f32 %v205, 0.6931472
    %v207 = vmul.f32 -0.5, %v183
    %v208 = vadd.f32 %v207, 1.0
    %v209 = vmul.f32 %v208, %v183
    %v210 = vand.u32 2147483647, %v183
    %vm211 = vcmp.lt.f32.partialorder %v210, 0.0004427343
    %v212 = vsel %vm211, %v209, %v206
    %v213 = vadd.f32 %v185, 1.0
    %v214 = vlog2.pop %v213
    %v215 = vmul.f32 %v214, 0.6931472
    %v216 = vmul.f32 -0.5, %v185
    %v217 = vadd.f32 %v216, 1.0
    %v218 = vmul.f32 %v217, %v185
    %v219 = vand.u32 2147483647, %v185
    %vm220 = vcmp.lt.f32.partialorder %v219, 0.0004427343
    %v221 = vsel %vm220, %v218, %v215
    %v222 = vsel %vm170, %v166, %v194
    %v223 = vsel %vm171, %v167, %v203
    %v224 = vsel %vm172, %v168, %v212
    %v225 = vsel %vm173, %v169, %v221
    %v226 = vsub.f32 0.0, %v222
    %v227 = vsub.f32 0.0, %v223
    %v228 = vsub.f32 0.0, %v224
    %v229 = vsub.f32 0.0, %v225
    %v230 = vmul.f32 %v226, %v162
    %v231 = vmul.f32 %v227, %v163
    %v232 = vmul.f32 %v228, %v164
    %v233 = vmul.f32 %v229, %v165
    %v234 = vmul.f32 %v230, 1.442695
    %v235 = vpow.pop %v234
    %v236 = vmul.f32 %v231, 1.442695
    %v237 = vpow.pop %v236
    %v238 = vmul.f32 %v232, 1.442695
    %v239 = vpow.pop %v238
    %v240 = vmul.f32 %v233, 1.442695
    %v241 = vpow.pop %v240
    %v242 = vsub.f32 1.0, %v235
    %v243 = vsub.f32 1.0, %v237
    %v244 = vsub.f32 1.0, %v239
    %v245 = vsub.f32 1.0, %v241
    %246 = vst [vmem:[#allocation3] sm:$0xff] %v242
    %247 = vst [vmem:[#allocation3 + $0x8] sm:$0xff] %v243
    %248 = vst [vmem:[#allocation3 + $0x10] sm:$0xff] %v244
    %249 = vst [vmem:[#allocation3 + $0x18] sm:$0xff] %v245
    // Predicated region
    $region22: #{tpu_custom_call.1} parent=1 // pred_check
      _
    $region23: #{tpu_custom_call.1} parent=1 // pred_check_branch
      %251 = sbr.rel (0) target = $region25
    $region24: #{tpu_custom_call.1} parent=1 // pred_region
      %253 = vsyncadd [#allocation4], 0
      %s254 = sshll.u32 [#allocation3], 4
      %s255 = int_to_ptr.vmem [resolvable:$true] %s254
      %s256 = sshll.u32 %s5, 4
      %s257 = int_to_ptr.hbm [resolvable:$true] %s256
      %262 = dma.vmem_to_hbm [thread:$0]  %s255, 512, %s257, [#allocation4], 128, 128, 8
    $region25: #{tpu_custom_call.1} parent=1 // pred_fallthru
      _
    // Predicated region
    $region26: #{tpu_custom_call.1} parent=1 // pred_check
      _
    $region27: #{tpu_custom_call.1} parent=1 // pred_check_branch
      %264 = sbr.rel (0) target = $region29
    $region28: #{tpu_custom_call.1} parent=1 // pred_region
      %266 = dma.done [#allocation4], 512
    $region29: #{tpu_custom_call.1} parent=1 // pred_fallthru
      _
    %267 = vsyncpa [#allocation4], 1

</llo_original>
